<compile_context>
chip_gen: v7x
topology: tpu7x:2x2x1
jax: 0.10.0
libtpu: 0.0.40
codegen_flags: <defaults>
</compile_context>

<pallas_src>
import functools
import math

import jax
import jax.numpy as jnp
from jax.experimental import pallas as pl
from jax.experimental.pallas import tpu as pltpu

# ---- model config (small, consistent with the PyTorch module) ----
MASKED = True
CONTEXT_LENGTH = 8     # tokens
EMB_DIM = 32
N_HEADS = 4
QKV_BIAS = True
HEAD_DIM = EMB_DIM // N_HEADS


def self_attention_kernel(x_ref, wqkv_ref, bqkv_ref, wo_ref, bo_ref, mask_ref,
                          o_ref, ctx_scratch, *, n_heads):
    # x_ref: (1, T, D) -- one batch element per grid step.
    _, T, D = x_ref.shape
    dh = D // n_heads

    x_bf = x_ref[0].astype(jnp.bfloat16)                        # (T, D) bf16

    # One fused QKV projection: single MXU push, K = D, bf16 inputs, f32 acc.
    # Q columns / bias already carry the 1/sqrt(dh) scale (folded in wrapper).
    qkv = jnp.dot(x_bf, wqkv_ref[...],
                  preferred_element_type=jnp.float32) + bqkv_ref[...]   # (T, 3D) f32

    mask_bias = mask_ref[...]                                    # (T, T), 0 / -1e30

    for h in range(n_heads):                                     # short, unrolled
        qh = qkv[:, h * dh:(h + 1) * dh].astype(jnp.bfloat16)            # (T, dh)
        kh = qkv[:, D + h * dh: D + (h + 1) * dh].astype(jnp.bfloat16)   # (T, dh)
        vh = qkv[:, 2 * D + h * dh: 2 * D + (h + 1) * dh].astype(jnp.bfloat16)

        # q @ k^T without materializing a transpose; additive causal mask.
        s = jnp.einsum('qd,kd->qk', qh, kh,
                       preferred_element_type=jnp.float32) + mask_bias   # (T, T)

        # numerically-stable softmax; divide goes to the EUP slot.
        m = jnp.max(s, axis=-1, keepdims=True)
        e = jnp.exp(s - m)
        w = e * pl.reciprocal(jnp.sum(e, axis=-1, keepdims=True), approx=True)

        # Each head's context lands in its disjoint static lane range.
        ctx_scratch[:, h * dh:(h + 1) * dh] = jnp.dot(
            w.astype(jnp.bfloat16), vh, preferred_element_type=jnp.float32)

    # ONE output projection with full K = D contraction (instead of 4 tiny folds).
    ctx = ctx_scratch[...].astype(jnp.bfloat16)                  # (T, D)
    out = jnp.dot(ctx, wo_ref[...],
                  preferred_element_type=jnp.float32) + bo_ref[...]      # (T, D)
    o_ref[0] = out.astype(o_ref.dtype)


def self_attention(x, params):
    B, T, D = x.shape
    wq, bq, wk, bk, wv, bv, wo, bo = params
    scale = 1.0 / math.sqrt(D // N_HEADS)

    # Free layout plumbing in the wrapper: fuse + pre-transpose all weights so the
    # kernel sees (in, out) layouts, fold the softmax scale into Q, cast to bf16.
    wqkv = jnp.concatenate([wq.T * scale, wk.T, wv.T], axis=1).astype(jnp.bfloat16)  # (D, 3D)
    bqkv = jnp.concatenate([bq * scale, bk, bv], axis=1)          # (1, 3D) f32
    wo_t = wo.T.astype(jnp.bfloat16)                              # (D, D) (in, out)

    # Additive mask bias: 0 where attention allowed, -1e30 where masked.
    if MASKED:
        upper = jnp.triu(jnp.ones((T, T), dtype=bool), k=1)
        mask_bias = jnp.where(upper, jnp.float32(-1e30), jnp.float32(0.0))
    else:
        mask_bias = jnp.zeros((T, T), jnp.float32)

    const2d = lambda shape: pl.BlockSpec(shape, lambda b: (0, 0))  # weights stay resident

    kernel = functools.partial(self_attention_kernel, n_heads=N_HEADS)

    out = pl.pallas_call(
        kernel,
        out_shape=jax.ShapeDtypeStruct((B, T, D), x.dtype),
        grid_spec=pltpu.PrefetchScalarGridSpec(
            num_scalar_prefetch=0,
            grid=(B,),                                            # one batch per step
            in_specs=[
                pl.BlockSpec((1, T, D), lambda b: (b, 0, 0)),     # x[b]
                const2d((D, 3 * D)),                              # fused Wqkv (bf16)
                const2d((1, 3 * D)),                              # fused bias
                const2d((D, D)),                                  # Wo (bf16)
                const2d((1, D)),                                  # bo
                const2d((T, T)),                                  # additive mask bias
            ],
            out_specs=pl.BlockSpec((1, T, D), lambda b: (b, 0, 0)),
            scratch_shapes=[pltpu.VMEM((T, D), jnp.float32)],     # assembled ctx
        ),
        # Batch axis is independent -> "parallel": lets v7x use both TensorCores.
        compiler_params=pltpu.CompilerParams(dimension_semantics=("parallel",)),
    )(x, wqkv, bqkv, wo_t, bo, mask_bias)

    return out


def reference(x, params):
    wq, bq, wk, bk, wv, bv, wo, bo = params
    B, T, D = x.shape
    q = x @ wq.T + bq[0]
    k = x @ wk.T + bk[0]
    v = x @ wv.T + bv[0]
    qs = q.reshape(B, T, N_HEADS, HEAD_DIM).transpose(0, 2, 1, 3)
    ks = k.reshape(B, T, N_HEADS, HEAD_DIM).transpose(0, 2, 1, 3)
    vs = v.reshape(B, T, N_HEADS, HEAD_DIM).transpose(0, 2, 1, 3)
    s = jnp.einsum("bhqd,bhkd->bhqk", qs, ks) / math.sqrt(HEAD_DIM)
    if MASKED:
        mask = jnp.triu(jnp.ones((T, T), bool), k=1)
        s = jnp.where(mask, -jnp.inf, s)
    w = jax.nn.softmax(s, axis=-1)
    ctx = jnp.einsum("bhqk,bhkd->bhqd", w, vs).transpose(0, 2, 1, 3).reshape(B, T, D)
    return ctx @ wo.T + bo[0]


def init_params(key):
    # Deterministic init mimicking PyTorch Linear defaults: U(-1/sqrt(fan_in), 1/sqrt(fan_in))
    ks = jax.random.split(key, 8)
    bound = 1.0 / math.sqrt(EMB_DIM)
    u = lambda k, shape: jax.random.uniform(k, shape, jnp.float32, -bound, bound)
    wq, bq = u(ks[0], (EMB_DIM, EMB_DIM)), u(ks[1], (1, EMB_DIM))
    wk, bk = u(ks[2], (EMB_DIM, EMB_DIM)), u(ks[3], (1, EMB_DIM))
    wv, bv = u(ks[4], (EMB_DIM, EMB_DIM)), u(ks[5], (1, EMB_DIM))
    wo, bo = u(ks[6], (EMB_DIM, EMB_DIM)), u(ks[7], (1, EMB_DIM))
    return (wq, bq, wk, bk, wv, bv, wo, bo)


if __name__ == "__main__":
    key = jax.random.PRNGKey(0)
    k_x, k_p = jax.random.split(key)
    B, T, D = 2, CONTEXT_LENGTH, EMB_DIM
    x = jax.random.normal(k_x, (B, T, D), jnp.float32)
    params = init_params(k_p)

    out = self_attention(x, params)
    out = jax.block_until_ready(out)

    ref = reference(x, params)
    assert out.shape == (B, T, D)
    # Tolerance accounts for bf16 MXU inputs (f32 accumulation) and the
    # approximate EUP reciprocal in the softmax denominator.
    assert jnp.allclose(out, ref, atol=2e-2, rtol=2e-2), "mismatch vs JAX reference"
    print("KERNEL_OK")
</pallas_src>

<mosaic_0001>
module attributes {stable_mosaic.version = 11 : i64} {
  func.func @self_attention_kernel(%arg0: i32, %arg1: memref<1x8x32xf32, #tpu.memory_space<vmem>>, %arg2: memref<32x96xbf16, #tpu.memory_space<vmem>>, %arg3: memref<1x96xf32, #tpu.memory_space<vmem>>, %arg4: memref<32x32xbf16, #tpu.memory_space<vmem>>, %arg5: memref<1x32xf32, #tpu.memory_space<vmem>>, %arg6: memref<8x8xf32, #tpu.memory_space<vmem>>, %arg7: memref<1x8x32xf32, #tpu.memory_space<vmem>>, %arg8: memref<8x32xf32, #tpu.memory_space<vmem>>) attributes {dimension_semantics = [#tpu.dimension_semantics<parallel>], iteration_bounds = array<i64: 2>, scalar_prefetch = 0 : i64, scratch_operands = 1 : i64, tpu.core_type = #tpu.core_type<tc>, window_params = [{transform_indices = @transform_0, window_bounds = array<i64: 1, 8, 32>}, {pipeline_mode = #tpu.pipeline_mode<synchronous>, transform_indices = @transform_1, window_bounds = array<i64: 32, 96>}, {pipeline_mode = #tpu.pipeline_mode<synchronous>, transform_indices = @transform_2, window_bounds = array<i64: 1, 96>}, {pipeline_mode = #tpu.pipeline_mode<synchronous>, transform_indices = @transform_3, window_bounds = array<i64: 32, 32>}, {pipeline_mode = #tpu.pipeline_mode<synchronous>, transform_indices = @transform_4, window_bounds = array<i64: 1, 32>}, {pipeline_mode = #tpu.pipeline_mode<synchronous>, transform_indices = @transform_5, window_bounds = array<i64: 8, 8>}, {transform_indices = @transform_6, window_bounds = array<i64: 1, 8, 32>}]} {
    %c0 = arith.constant 0 : index
    %c0_0 = arith.constant 0 : index
    %c0_1 = arith.constant 0 : index
    %0 = vector.load %arg1[%c0, %c0_0, %c0_1] : memref<1x8x32xf32, #tpu.memory_space<vmem>>, vector<1x8x32xf32>
    %1 = vector.shape_cast %0 : vector<1x8x32xf32> to vector<8x32xf32>
    %2 = arith.truncf %1 : vector<8x32xf32> to vector<8x32xbf16>
    %c0_2 = arith.constant 0 : index
    %c0_3 = arith.constant 0 : index
    %3 = vector.load %arg2[%c0_2, %c0_3] : memref<32x96xbf16, #tpu.memory_space<vmem>>, vector<32x96xbf16>
    %cst = arith.constant dense<0.000000e+00> : vector<8x96xf32>
    %4 = tpu.matmul %2, %3, %cst {dimension_numbers = #tpu.dot_dimension_numbers<[1], [0], [0], [1], [0, 0, 1, 1], [], []>} : vector<8x32xbf16>, vector<32x96xbf16>, vector<8x96xf32> -> vector<8x96xf32>
    %c0_4 = arith.constant 0 : index
    %c0_5 = arith.constant 0 : index
    %5 = vector.load %arg3[%c0_4, %c0_5] : memref<1x96xf32, #tpu.memory_space<vmem>>, vector<1x96xf32>
    %6 = vector.broadcast %5 : vector<1x96xf32> to vector<8x96xf32>
    %7 = arith.addf %4, %6 : vector<8x96xf32>
    %c0_6 = arith.constant 0 : index
    %c0_7 = arith.constant 0 : index
    %8 = vector.load %arg6[%c0_6, %c0_7] : memref<8x8xf32, #tpu.memory_space<vmem>>, vector<8x8xf32>
    %9 = vector.extract_strided_slice %7 {offsets = [0, 0], sizes = [8, 8], strides = [1, 1]} : vector<8x96xf32> to vector<8x8xf32>
    %10 = arith.truncf %9 : vector<8x8xf32> to vector<8x8xbf16>
    %11 = vector.extract_strided_slice %7 {offsets = [0, 32], sizes = [8, 8], strides = [1, 1]} : vector<8x96xf32> to vector<8x8xf32>
    %12 = arith.truncf %11 : vector<8x8xf32> to vector<8x8xbf16>
    %13 = vector.extract_strided_slice %7 {offsets = [0, 64], sizes = [8, 8], strides = [1, 1]} : vector<8x96xf32> to vector<8x8xf32>
    %14 = arith.truncf %13 : vector<8x8xf32> to vector<8x8xbf16>
    "tpu.trace_start"() <{level = 10 : i32, message = "qd,kd->qk"}> : () -> ()
    %cst_8 = arith.constant dense<0.000000e+00> : vector<8x8xf32>
    %15 = tpu.matmul %10, %12, %cst_8 {dimension_numbers = #tpu.dot_dimension_numbers<[1], [1], [0], [0], [0, 0, 1, 0], [], []>} : vector<8x8xbf16>, vector<8x8xbf16>, vector<8x8xf32> -> vector<8x8xf32>
    "tpu.trace_stop"() : () -> ()
    %16 = arith.addf %15, %8 : vector<8x8xf32>
    %cst_9 = arith.constant dense<0xFF800000> : vector<8xf32>
    %17 = vector.multi_reduction <maximumf>, %16, %cst_9 [1] : vector<8x8xf32> to vector<8xf32>
    %18 = vector.shape_cast %17 : vector<8xf32> to vector<8x1xf32>
    %19 = vector.broadcast %18 : vector<8x1xf32> to vector<8x8xf32>
    %20 = arith.subf %16, %19 : vector<8x8xf32>
    %21 = math.exp %20 : vector<8x8xf32>
    %cst_10 = arith.constant dense<0.000000e+00> : vector<8xf32>
    %22 = vector.multi_reduction <add>, %21, %cst_10 [1] : vector<8x8xf32> to vector<8xf32>
    %23 = vector.shape_cast %22 : vector<8xf32> to vector<8x1xf32>
    %24 = tpu.reciprocal %23 {approx = true} : vector<8x1xf32> -> vector<8x1xf32>
    %25 = vector.broadcast %24 : vector<8x1xf32> to vector<8x8xf32>
    %26 = arith.mulf %21, %25 : vector<8x8xf32>
    %27 = arith.truncf %26 : vector<8x8xf32> to vector<8x8xbf16>
    %cst_11 = arith.constant dense<0.000000e+00> : vector<8x8xf32>
    %28 = tpu.matmul %27, %14, %cst_11 {dimension_numbers = #tpu.dot_dimension_numbers<[1], [0], [0], [1], [0, 0, 1, 1], [], []>} : vector<8x8xbf16>, vector<8x8xbf16>, vector<8x8xf32> -> vector<8x8xf32>
    %c0_12 = arith.constant 0 : index
    %c0_13 = arith.constant 0 : index
    %29 = vector.load %arg8[%c0_12, %c0_13] : memref<8x32xf32, #tpu.memory_space<vmem>>, vector<8x8xf32>
    tpu.vector_store %arg8[%c0_12, %c0_13], %28 {strides = array<i32>} : memref<8x32xf32, #tpu.memory_space<vmem>>, vector<8x8xf32>,
    %30 = vector.extract_strided_slice %7 {offsets = [0, 8], sizes = [8, 8], strides = [1, 1]} : vector<8x96xf32> to vector<8x8xf32>
    %31 = arith.truncf %30 : vector<8x8xf32> to vector<8x8xbf16>
    %32 = vector.extract_strided_slice %7 {offsets = [0, 40], sizes = [8, 8], strides = [1, 1]} : vector<8x96xf32> to vector<8x8xf32>
    %33 = arith.truncf %32 : vector<8x8xf32> to vector<8x8xbf16>
    %34 = vector.extract_strided_slice %7 {offsets = [0, 72], sizes = [8, 8], strides = [1, 1]} : vector<8x96xf32> to vector<8x8xf32>
    %35 = arith.truncf %34 : vector<8x8xf32> to vector<8x8xbf16>
    "tpu.trace_start"() <{level = 10 : i32, message = "qd,kd->qk"}> : () -> ()
    %cst_14 = arith.constant dense<0.000000e+00> : vector<8x8xf32>
    %36 = tpu.matmul %31, %33, %cst_14 {dimension_numbers = #tpu.dot_dimension_numbers<[1], [1], [0], [0], [0, 0, 1, 0], [], []>} : vector<8x8xbf16>, vector<8x8xbf16>, vector<8x8xf32> -> vector<8x8xf32>
    "tpu.trace_stop"() : () -> ()
    %37 = arith.addf %36, %8 : vector<8x8xf32>
    %cst_15 = arith.constant dense<0xFF800000> : vector<8xf32>
    %38 = vector.multi_reduction <maximumf>, %37, %cst_15 [1] : vector<8x8xf32> to vector<8xf32>
    %39 = vector.shape_cast %38 : vector<8xf32> to vector<8x1xf32>
    %40 = vector.broadcast %39 : vector<8x1xf32> to vector<8x8xf32>
    %41 = arith.subf %37, %40 : vector<8x8xf32>
    %42 = math.exp %41 : vector<8x8xf32>
    %cst_16 = arith.constant dense<0.000000e+00> : vector<8xf32>
    %43 = vector.multi_reduction <add>, %42, %cst_16 [1] : vector<8x8xf32> to vector<8xf32>
    %44 = vector.shape_cast %43 : vector<8xf32> to vector<8x1xf32>
    %45 = tpu.reciprocal %44 {approx = true} : vector<8x1xf32> -> vector<8x1xf32>
    %46 = vector.broadcast %45 : vector<8x1xf32> to vector<8x8xf32>
    %47 = arith.mulf %42, %46 : vector<8x8xf32>
    %48 = arith.truncf %47 : vector<8x8xf32> to vector<8x8xbf16>
    %cst_17 = arith.constant dense<0.000000e+00> : vector<8x8xf32>
    %49 = tpu.matmul %48, %35, %cst_17 {dimension_numbers = #tpu.dot_dimension_numbers<[1], [0], [0], [1], [0, 0, 1, 1], [], []>} : vector<8x8xbf16>, vector<8x8xbf16>, vector<8x8xf32> -> vector<8x8xf32>
    %c0_18 = arith.constant 0 : index
    %c8 = arith.constant 8 : index
    %50 = vector.load %arg8[%c0_18, %c8] : memref<8x32xf32, #tpu.memory_space<vmem>>, vector<8x8xf32>
    tpu.vector_store %arg8[%c0_18, %c8], %49 {strides = array<i32>} : memref<8x32xf32, #tpu.memory_space<vmem>>, vector<8x8xf32>,
    %51 = vector.extract_strided_slice %7 {offsets = [0, 16], sizes = [8, 8], strides = [1, 1]} : vector<8x96xf32> to vector<8x8xf32>
    %52 = arith.truncf %51 : vector<8x8xf32> to vector<8x8xbf16>
    %53 = vector.extract_strided_slice %7 {offsets = [0, 48], sizes = [8, 8], strides = [1, 1]} : vector<8x96xf32> to vector<8x8xf32>
    %54 = arith.truncf %53 : vector<8x8xf32> to vector<8x8xbf16>
    %55 = vector.extract_strided_slice %7 {offsets = [0, 80], sizes = [8, 8], strides = [1, 1]} : vector<8x96xf32> to vector<8x8xf32>
    %56 = arith.truncf %55 : vector<8x8xf32> to vector<8x8xbf16>
    "tpu.trace_start"() <{level = 10 : i32, message = "qd,kd->qk"}> : () -> ()
    %cst_19 = arith.constant dense<0.000000e+00> : vector<8x8xf32>
    %57 = tpu.matmul %52, %54, %cst_19 {dimension_numbers = #tpu.dot_dimension_numbers<[1], [1], [0], [0], [0, 0, 1, 0], [], []>} : vector<8x8xbf16>, vector<8x8xbf16>, vector<8x8xf32> -> vector<8x8xf32>
    "tpu.trace_stop"() : () -> ()
    %58 = arith.addf %57, %8 : vector<8x8xf32>
    %cst_20 = arith.constant dense<0xFF800000> : vector<8xf32>
    %59 = vector.multi_reduction <maximumf>, %58, %cst_20 [1] : vector<8x8xf32> to vector<8xf32>
    %60 = vector.shape_cast %59 : vector<8xf32> to vector<8x1xf32>
    %61 = vector.broadcast %60 : vector<8x1xf32> to vector<8x8xf32>
    %62 = arith.subf %58, %61 : vector<8x8xf32>
    %63 = math.exp %62 : vector<8x8xf32>
    %cst_21 = arith.constant dense<0.000000e+00> : vector<8xf32>
    %64 = vector.multi_reduction <add>, %63, %cst_21 [1] : vector<8x8xf32> to vector<8xf32>
    %65 = vector.shape_cast %64 : vector<8xf32> to vector<8x1xf32>
    %66 = tpu.reciprocal %65 {approx = true} : vector<8x1xf32> -> vector<8x1xf32>
    %67 = vector.broadcast %66 : vector<8x1xf32> to vector<8x8xf32>
    %68 = arith.mulf %63, %67 : vector<8x8xf32>
    %69 = arith.truncf %68 : vector<8x8xf32> to vector<8x8xbf16>
    %cst_22 = arith.constant dense<0.000000e+00> : vector<8x8xf32>
    %70 = tpu.matmul %69, %56, %cst_22 {dimension_numbers = #tpu.dot_dimension_numbers<[1], [0], [0], [1], [0, 0, 1, 1], [], []>} : vector<8x8xbf16>, vector<8x8xbf16>, vector<8x8xf32> -> vector<8x8xf32>
    %c0_23 = arith.constant 0 : index
    %c16 = arith.constant 16 : index
    %71 = vector.load %arg8[%c0_23, %c16] : memref<8x32xf32, #tpu.memory_space<vmem>>, vector<8x8xf32>
    tpu.vector_store %arg8[%c0_23, %c16], %70 {strides = array<i32>} : memref<8x32xf32, #tpu.memory_space<vmem>>, vector<8x8xf32>,
    %72 = vector.extract_strided_slice %7 {offsets = [0, 24], sizes = [8, 8], strides = [1, 1]} : vector<8x96xf32> to vector<8x8xf32>
    %73 = arith.truncf %72 : vector<8x8xf32> to vector<8x8xbf16>
    %74 = vector.extract_strided_slice %7 {offsets = [0, 56], sizes = [8, 8], strides = [1, 1]} : vector<8x96xf32> to vector<8x8xf32>
    %75 = arith.truncf %74 : vector<8x8xf32> to vector<8x8xbf16>
    %76 = vector.extract_strided_slice %7 {offsets = [0, 88], sizes = [8, 8], strides = [1, 1]} : vector<8x96xf32> to vector<8x8xf32>
    %77 = arith.truncf %76 : vector<8x8xf32> to vector<8x8xbf16>
    "tpu.trace_start"() <{level = 10 : i32, message = "qd,kd->qk"}> : () -> ()
    %cst_24 = arith.constant dense<0.000000e+00> : vector<8x8xf32>
    %78 = tpu.matmul %73, %75, %cst_24 {dimension_numbers = #tpu.dot_dimension_numbers<[1], [1], [0], [0], [0, 0, 1, 0], [], []>} : vector<8x8xbf16>, vector<8x8xbf16>, vector<8x8xf32> -> vector<8x8xf32>
    "tpu.trace_stop"() : () -> ()
    %79 = arith.addf %78, %8 : vector<8x8xf32>
    %cst_25 = arith.constant dense<0xFF800000> : vector<8xf32>
    %80 = vector.multi_reduction <maximumf>, %79, %cst_25 [1] : vector<8x8xf32> to vector<8xf32>
    %81 = vector.shape_cast %80 : vector<8xf32> to vector<8x1xf32>
    %82 = vector.broadcast %81 : vector<8x1xf32> to vector<8x8xf32>
    %83 = arith.subf %79, %82 : vector<8x8xf32>
    %84 = math.exp %83 : vector<8x8xf32>
    %cst_26 = arith.constant dense<0.000000e+00> : vector<8xf32>
    %85 = vector.multi_reduction <add>, %84, %cst_26 [1] : vector<8x8xf32> to vector<8xf32>
    %86 = vector.shape_cast %85 : vector<8xf32> to vector<8x1xf32>
    %87 = tpu.reciprocal %86 {approx = true} : vector<8x1xf32> -> vector<8x1xf32>
    %88 = vector.broadcast %87 : vector<8x1xf32> to vector<8x8xf32>
    %89 = arith.mulf %84, %88 : vector<8x8xf32>
    %90 = arith.truncf %89 : vector<8x8xf32> to vector<8x8xbf16>
    %cst_27 = arith.constant dense<0.000000e+00> : vector<8x8xf32>
    %91 = tpu.matmul %90, %77, %cst_27 {dimension_numbers = #tpu.dot_dimension_numbers<[1], [0], [0], [1], [0, 0, 1, 1], [], []>} : vector<8x8xbf16>, vector<8x8xbf16>, vector<8x8xf32> -> vector<8x8xf32>
    %c0_28 = arith.constant 0 : index
    %c24 = arith.constant 24 : index
    %92 = vector.load %arg8[%c0_28, %c24] : memref<8x32xf32, #tpu.memory_space<vmem>>, vector<8x8xf32>
    tpu.vector_store %arg8[%c0_28, %c24], %91 {strides = array<i32>} : memref<8x32xf32, #tpu.memory_space<vmem>>, vector<8x8xf32>,
    %c0_29 = arith.constant 0 : index
    %c0_30 = arith.constant 0 : index
    %93 = vector.load %arg8[%c0_29, %c0_30] : memref<8x32xf32, #tpu.memory_space<vmem>>, vector<8x32xf32>
    %94 = arith.truncf %93 : vector<8x32xf32> to vector<8x32xbf16>
    %c0_31 = arith.constant 0 : index
    %c0_32 = arith.constant 0 : index
    %95 = vector.load %arg4[%c0_31, %c0_32] : memref<32x32xbf16, #tpu.memory_space<vmem>>, vector<32x32xbf16>
    %cst_33 = arith.constant dense<0.000000e+00> : vector<8x32xf32>
    %96 = tpu.matmul %94, %95, %cst_33 {dimension_numbers = #tpu.dot_dimension_numbers<[1], [0], [0], [1], [0, 0, 1, 1], [], []>} : vector<8x32xbf16>, vector<32x32xbf16>, vector<8x32xf32> -> vector<8x32xf32>
    %c0_34 = arith.constant 0 : index
    %c0_35 = arith.constant 0 : index
    %97 = vector.load %arg5[%c0_34, %c0_35] : memref<1x32xf32, #tpu.memory_space<vmem>>, vector<1x32xf32>
    %98 = vector.broadcast %97 : vector<1x32xf32> to vector<8x32xf32>
    %99 = arith.addf %96, %98 : vector<8x32xf32>
    %c0_36 = arith.constant 0 : index
    %c0_37 = arith.constant 0 : index
    %c0_38 = arith.constant 0 : index
    %100 = vector.load %arg7[%c0_36, %c0_37, %c0_38] : memref<1x8x32xf32, #tpu.memory_space<vmem>>, vector<1x8x32xf32>
    %101 = vector.shape_cast %100 : vector<1x8x32xf32> to vector<8x32xf32>
    %102 = vector.shape_cast %99 : vector<8x32xf32> to vector<1x8x32xf32>
    tpu.vector_store %arg7[%c0_36, %c0_37, %c0_38], %102 {strides = array<i32>} : memref<1x8x32xf32, #tpu.memory_space<vmem>>, vector<1x8x32xf32>,
    return
  }
  func.func @transform_0(%arg0: i32) -> (i32, i32, i32) {
    %c0_i32 = arith.constant 0 : i32
    %c0_i32_0 = arith.constant 0 : i32
    %c0_i32_1 = arith.constant 0 : i32
    return %arg0, %c0_i32, %c0_i32_0 : i32, i32, i32
  }
  func.func @transform_1(%arg0: i32) -> (i32, i32) {
    %c0_i32 = arith.constant 0 : i32
    %c0_i32_0 = arith.constant 0 : i32
    %c0_i32_1 = arith.constant 0 : i32
    return %c0_i32, %c0_i32_0 : i32, i32
  }
  func.func @transform_2(%arg0: i32) -> (i32, i32) {
    %c0_i32 = arith.constant 0 : i32
    %c0_i32_0 = arith.constant 0 : i32
    %c0_i32_1 = arith.constant 0 : i32
    return %c0_i32, %c0_i32_0 : i32, i32
  }
  func.func @transform_3(%arg0: i32) -> (i32, i32) {
    %c0_i32 = arith.constant 0 : i32
    %c0_i32_0 = arith.constant 0 : i32
    %c0_i32_1 = arith.constant 0 : i32
    return %c0_i32, %c0_i32_0 : i32, i32
  }
  func.func @transform_4(%arg0: i32) -> (i32, i32) {
    %c0_i32 = arith.constant 0 : i32
    %c0_i32_0 = arith.constant 0 : i32
    %c0_i32_1 = arith.constant 0 : i32
    return %c0_i32, %c0_i32_0 : i32, i32
  }
  func.func @transform_5(%arg0: i32) -> (i32, i32) {
    %c0_i32 = arith.constant 0 : i32
    %c0_i32_0 = arith.constant 0 : i32
    %c0_i32_1 = arith.constant 0 : i32
    return %c0_i32, %c0_i32_0 : i32, i32
  }
  func.func @transform_6(%arg0: i32) -> (i32, i32, i32) {
    %c0_i32 = arith.constant 0 : i32
    %c0_i32_0 = arith.constant 0 : i32
    %c0_i32_1 = arith.constant 0 : i32
    return %arg0, %c0_i32, %c0_i32_0 : i32, i32, i32
  }
}

</mosaic_0001>

<llo_original>
// kernel: tpu_custom_call.1
$region0: #{tpu_custom_call.1}
  #allocation0 [shape = 'u32[]', space=smem, size = 0x4, offset = 0x4, fixed_abs, tag = 'smem constant byte address 0x4 - core index']
  #allocation1 [shape = 'u32[144,128]{1,0:T(1,128)}', space=vmem, size = 0x12000, scoped, tag = 'internal scratch']
  #allocation2 [shape = 'f32[8,32]{1,0:T(8,128)}', space=vmem, size = 0x1000, scoped, tag = 'scratch operand']
  %s0 = inlined_call_operand.hbm [shape: f32[2,8,32], index: 0, kind: input, shape index: {}]
  %s1 = inlined_call_operand.hbm [shape: bf16[32,96], index: 1, kind: input, shape index: {}]
  %s2 = inlined_call_operand.vmem [shape: f32[1,96], index: 2, kind: input, shape index: {}]
  %s3 = inlined_call_operand.hbm [shape: bf16[32,32], index: 3, kind: input, shape index: {}]
  %s4 = inlined_call_operand.vmem [shape: f32[1,32], index: 4, kind: input, shape index: {}]
  %s5 = inlined_call_operand.vmem [shape: f32[8,8], index: 5, kind: input, shape index: {}]
  %s6 = inlined_call_operand.hbm [shape: f32[2,8,32], index: 6, kind: output, shape index: {}]
  %s7 = sld [smem:[#allocation0]]
  $region69: #{tpu_custom_call.1} parent=0
    _
  %s9 = ssub.s32 1, %s7
  %s10 = scalar_select 0, %s9, %s7
  $region1: #{tpu_custom_call.1} parent=0
    #allocation3 [shape = 'u8[8192]{0}', space=vmem, size = 0x2000, scoped, tag = 'input window, operand 0']
    #allocation4 [shape = 's32[2]{0}', space=sflag, size = 0x8, scoped, tag = 'scoped memory for tpu_custom_call.1']
    #allocation5 [shape = 's32[2]{0}', space=sflag, size = 0x8, scoped, tag = 'scoped memory for tpu_custom_call.1']
    #allocation6 [shape = 'u8[8192]{0}', space=vmem, size = 0x2000, scoped, tag = 'input window, operand 1, single buffered']
    #allocation7 [shape = 's32[1]{0}', space=sflag, size = 0x4, scoped, tag = 'scoped memory for tpu_custom_call.1']
    #allocation8 [shape = 'u8[8192]{0}', space=vmem, size = 0x2000, scoped, tag = 'input window, operand 3, single buffered']
    #allocation9 [shape = 'u8[8192]{0}', space=vmem, size = 0x2000, scoped, tag = 'output window, operand 0']
    %11 = vsyncpa [#allocation4], 0
    %s12 = scalar_lea.sflag [#allocation4], 1
    %13 = vsyncpa %s12, 0
    %14 = vsyncpa [#allocation7], 0
    %15 = vsyncpa [#allocation5], 0
    %s16 = scalar_lea.sflag [#allocation5], 1
    %17 = vsyncpa %s16, 0
    loop: start=0, step=1, limit=4
    $region2: #{tpu_custom_call.1} parent=1 // loop_pre_header
      _
    $region3: #{tpu_custom_call.1} parent=1 // loop_header
      %s19 = sphi 0, %s23
      %p20 = scmp.ge.s32.totalorder %s19, 4
      %s29 = sphi 0, %s31
      %s32 = sphi 0, %s29
      %s33 = sphi 0, %s32
      %s49 = sphi 0, %s33
      %s53 = sphi 0, %s53
      %s55 = sphi 0, %s53
      %s56 = sphi 0, %s55
      %s70 = sphi 0, %s56
      %s74 = sphi 0, %s74
      %s76 = sphi 0, %s74
      %s77 = sphi 0, %s76
      %s91 = sphi 0, %s77
      %s95 = sphi 0, %s95
      %s97 = sphi 0, %s95
      %s98 = sphi 0, %s97
      %s112 = sphi 0, %s98
      %s116 = sphi 0, %s116
      %s118 = sphi 0, %s116
      %s119 = sphi 0, %s118
      %s133 = sphi 0, %s119
      %s137 = sphi 0, %s137
      %s139 = sphi 0, %s137
      %s140 = sphi 0, %s139
      %s154 = sphi 0, %s140
      %s160 = sphi 0, %s162
      %s163 = sphi 0, %s160
      %s164 = sphi 0, %s163
      %s180 = sphi 0, %s164
    $region4: #{tpu_custom_call.1} parent=1 // loop_header_branch
      %22 = sbr.rel (%p20) target = $region8
    $region5: #{tpu_custom_call.1} parent=1 // loop_body
      %s24 = ssub.s32 %s19, 1
      %s25 = ssub.s32 %s19, 2
      %s26 = sadd.s32 %s19, 1
      %s27 = ssub.s32 %s19, %s26
      %p28 = scmp.eq.s32.totalorder %s27, 0
      %s30 = sadd.s32 %s29, 1
      %s31 = scalar_select %p28, %s29, %s30
      %p34 = pneg %p28
      %p35 = scmp.eq.s32.totalorder %s19, 1
      %p36 = por %p34, %p35
      %p37 = scmp.ne.s32.totalorder %s29, %s32
      %p38 = scmp.eq.s32.totalorder %s19, 0
      %p39 = por %p37, %p38
      %p40 = scmp.ne.s32.totalorder %s29, %s32
      %p41 = scmp.eq.s32.totalorder %s24, 1
      %p42 = por %p40, %p41
      %p43 = scmp.ne.s32.totalorder %s32, %s33
      %p44 = scmp.eq.s32.totalorder %s24, 0
      %p45 = por %p43, %p44
      %p46 = scmp.ne.s32.totalorder %s32, %s33
      %p47 = scmp.eq.s32.totalorder %s25, 1
      %p48 = por %p46, %p47
      %p50 = scmp.ne.s32.totalorder %s33, %s49
      %p51 = scmp.eq.s32.totalorder %s25, 0
      %p52 = por %p50, %p51
      %s54 = sadd.s32 %s53, 1
      %p57 = scmp.eq.s32.totalorder %s19, 1
      %p58 = scmp.ne.s32.totalorder %s53, %s55
      %p59 = scmp.eq.s32.totalorder %s19, 0
      %p60 = por %p58, %p59
      %p61 = scmp.ne.s32.totalorder %s53, %s55
      %p62 = scmp.eq.s32.totalorder %s24, 1
      %p63 = por %p61, %p62
      %p64 = scmp.ne.s32.totalorder %s55, %s56
      %p65 = scmp.eq.s32.totalorder %s24, 0
      %p66 = por %p64, %p65
      %p67 = scmp.ne.s32.totalorder %s55, %s56
      %p68 = scmp.eq.s32.totalorder %s25, 1
      %p69 = por %p67, %p68
      %p71 = scmp.ne.s32.totalorder %s56, %s70
      %p72 = scmp.eq.s32.totalorder %s25, 0
      %p73 = por %p71, %p72
      %s75 = sadd.s32 %s74, 1
      %p78 = scmp.eq.s32.totalorder %s19, 1
      %p79 = scmp.ne.s32.totalorder %s74, %s76
      %p80 = scmp.eq.s32.totalorder %s19, 0
      %p81 = por %p79, %p80
      %p82 = scmp.ne.s32.totalorder %s74, %s76
      %p83 = scmp.eq.s32.totalorder %s24, 1
      %p84 = por %p82, %p83
      %p85 = scmp.ne.s32.totalorder %s76, %s77
      %p86 = scmp.eq.s32.totalorder %s24, 0
      %p87 = por %p85, %p86
      %p88 = scmp.ne.s32.totalorder %s76, %s77
      %p89 = scmp.eq.s32.totalorder %s25, 1
      %p90 = por %p88, %p89
      %p92 = scmp.ne.s32.totalorder %s77, %s91
      %p93 = scmp.eq.s32.totalorder %s25, 0
      %p94 = por %p92, %p93
      %s96 = sadd.s32 %s95, 1
      %p99 = scmp.eq.s32.totalorder %s19, 1
      %p100 = scmp.ne.s32.totalorder %s95, %s97
      %p101 = scmp.eq.s32.totalorder %s19, 0
      %p102 = por %p100, %p101
      %p103 = scmp.ne.s32.totalorder %s95, %s97
      %p104 = scmp.eq.s32.totalorder %s24, 1
      %p105 = por %p103, %p104
      %p106 = scmp.ne.s32.totalorder %s97, %s98
      %p107 = scmp.eq.s32.totalorder %s24, 0
      %p108 = por %p106, %p107
      %p109 = scmp.ne.s32.totalorder %s97, %s98
      %p110 = scmp.eq.s32.totalorder %s25, 1
      %p111 = por %p109, %p110
      %p113 = scmp.ne.s32.totalorder %s98, %s112
      %p114 = scmp.eq.s32.totalorder %s25, 0
      %p115 = por %p113, %p114
      %s117 = sadd.s32 %s116, 1
      %p120 = scmp.eq.s32.totalorder %s19, 1
      %p121 = scmp.ne.s32.totalorder %s116, %s118
      %p122 = scmp.eq.s32.totalorder %s19, 0
      %p123 = por %p121, %p122
      %p124 = scmp.ne.s32.totalorder %s116, %s118
      %p125 = scmp.eq.s32.totalorder %s24, 1
      %p126 = por %p124, %p125
      %p127 = scmp.ne.s32.totalorder %s118, %s119
      %p128 = scmp.eq.s32.totalorder %s24, 0
      %p129 = por %p127, %p128
      %p130 = scmp.ne.s32.totalorder %s118, %s119
      %p131 = scmp.eq.s32.totalorder %s25, 1
      %p132 = por %p130, %p131
      %p134 = scmp.ne.s32.totalorder %s119, %s133
      %p135 = scmp.eq.s32.totalorder %s25, 0
      %p136 = por %p134, %p135
      %s138 = sadd.s32 %s137, 1
      %p141 = scmp.eq.s32.totalorder %s19, 1
      %p142 = scmp.ne.s32.totalorder %s137, %s139
      %p143 = scmp.eq.s32.totalorder %s19, 0
      %p144 = por %p142, %p143
      %p145 = scmp.ne.s32.totalorder %s137, %s139
      %p146 = scmp.eq.s32.totalorder %s24, 1
      %p147 = por %p145, %p146
      %p148 = scmp.ne.s32.totalorder %s139, %s140
      %p149 = scmp.eq.s32.totalorder %s24, 0
      %p150 = por %p148, %p149
      %p151 = scmp.ne.s32.totalorder %s139, %s140
      %p152 = scmp.eq.s32.totalorder %s25, 1
      %p153 = por %p151, %p152
      %p155 = scmp.ne.s32.totalorder %s140, %s154
      %p156 = scmp.eq.s32.totalorder %s25, 0
      %p157 = por %p155, %p156
      %s158 = ssub.s32 %s19, %s26
      %p159 = scmp.eq.s32.totalorder %s158, 0
      %s161 = sadd.s32 %s160, 1
      %s162 = scalar_select %p159, %s160, %s161
      %p165 = pneg %p159
      %p166 = scmp.eq.s32.totalorder %s19, 1
      %p167 = por %p165, %p166
      %p168 = scmp.ne.s32.totalorder %s160, %s163
      %p169 = scmp.eq.s32.totalorder %s19, 0
      %p170 = por %p168, %p169
      %p171 = scmp.ne.s32.totalorder %s160, %s163
      %p172 = scmp.eq.s32.totalorder %s24, 1
      %p173 = por %p171, %p172
      %p174 = scmp.ne.s32.totalorder %s163, %s164
      %p175 = scmp.eq.s32.totalorder %s24, 0
      %p176 = por %p174, %p175
      %p177 = scmp.ne.s32.totalorder %s163, %s164
      %p178 = scmp.eq.s32.totalorder %s25, 1
      %p179 = por %p177, %p178
      %p181 = scmp.ne.s32.totalorder %s164, %s180
      %p182 = scmp.eq.s32.totalorder %s25, 0
      %p183 = por %p181, %p182
      %p184 = scmp.le.s32.totalorder 1, %s19
      %p185 = scmp.lt.s32.totalorder %s19, 3
      %p186 = pnand %p184, %p185
      %p187 = pneg %p186
      // Predicated region
      $region9: #{tpu_custom_call.1} parent=5 // pred_check
        _
      $region10: #{tpu_custom_call.1} parent=5 // pred_check_branch
        %189 = sbr.rel (%p186) target = $region12
      $region11: #{tpu_custom_call.1} parent=5 // pred_region
        %s190 = ssub.s32 %s19, 1
        // Predicated region
        $region13: #{tpu_custom_call.1} parent=11 // pred_check
          %p191 = pneg %p66
        $region14: #{tpu_custom_call.1} parent=11 // pred_check_branch
          %193 = sbr.rel (%p191) target = $region16
        $region15: #{tpu_custom_call.1} parent=11 // pred_region
          %s195 = ssub.s32 256, 256
          %196 = vsyncadd [#allocation7], %s195
          %s197 = sshll.u32 [#allocation6], 4
          %s198 = int_to_ptr.vmem [resolvable:$true] %s197
          %203 = dma.hbm_to_vmem [thread:$0]  %s1, 256, %s198, [#allocation7], 64, 64, 4
        $region16: #{tpu_custom_call.1} parent=11 // pred_fallthru
          _
        // Predicated region
        $region17: #{tpu_custom_call.1} parent=11 // pred_check
          %p204 = pneg %p87
        $region18: #{tpu_custom_call.1} parent=11 // pred_check_branch
          %206 = sbr.rel (%p204) target = $region20
        $region19: #{tpu_custom_call.1} parent=11 // pred_region
          _
        $region20: #{tpu_custom_call.1} parent=11 // pred_fallthru
          _
        // Predicated region
        $region21: #{tpu_custom_call.1} parent=11 // pred_check
          %p207 = pneg %p108
        $region22: #{tpu_custom_call.1} parent=11 // pred_check_branch
          %209 = sbr.rel (%p207) target = $region24
        $region23: #{tpu_custom_call.1} parent=11 // pred_region
          %s211 = ssub.s32 256, 256
          %212 = vsyncadd [#allocation7], %s211
          %s213 = sshll.u32 [#allocation8], 4
          %s214 = int_to_ptr.vmem [resolvable:$true] %s213
          %219 = dma.hbm_to_vmem [thread:$0]  %s3, 256, %s214, [#allocation7], 64, 64, 4
        $region24: #{tpu_custom_call.1} parent=11 // pred_fallthru
          _
        // Predicated region
        $region25: #{tpu_custom_call.1} parent=11 // pred_check
          %p220 = pneg %p129
        $region26: #{tpu_custom_call.1} parent=11 // pred_check_branch
          %222 = sbr.rel (%p220) target = $region28
        $region27: #{tpu_custom_call.1} parent=11 // pred_region
          _
        $region28: #{tpu_custom_call.1} parent=11 // pred_fallthru
          _
        // Predicated region
        $region29: #{tpu_custom_call.1} parent=11 // pred_check
          %p223 = pneg %p150
        $region30: #{tpu_custom_call.1} parent=11 // pred_check_branch
          %225 = sbr.rel (%p223) target = $region32
        $region31: #{tpu_custom_call.1} parent=11 // pred_region
          _
        $region32: #{tpu_custom_call.1} parent=11 // pred_fallthru
          _
      $region12: #{tpu_custom_call.1} parent=5 // pred_fallthru
        _
      %p226 = scmp.lt.s32.totalorder %s19, 2
      // Predicated region
      $region33: #{tpu_custom_call.1} parent=5 // pred_check
        %p227 = pneg %p226
      $region34: #{tpu_custom_call.1} parent=5 // pred_check_branch
        %229 = sbr.rel (%p227) target = $region36
      $region35: #{tpu_custom_call.1} parent=5 // pred_region
        // Predicated region
        $region37: #{tpu_custom_call.1} parent=35 // pred_check
          %p230 = pneg %p39
        $region38: #{tpu_custom_call.1} parent=35 // pred_check_branch
          %232 = sbr.rel (%p230) target = $region40
        $region39: #{tpu_custom_call.1} parent=35 // pred_region
          %s233 = sand.u32 %s29, 1
          %s234 = scalar_lea.sflag [#allocation4], %s233
          %s235 = sand.u32 %s29, 1
          %s236 = smul.addr %s235, 8
          %s237 = scalar_lea.vmem [#allocation3], %s236
          %s239 = ssub.s32 128, 128
          %240 = vsyncadd %s234, %s239
          %s241 = smul.addr %s19, 128
          %s242 = scalar_lea.hbm %s0, %s241
          %s244 = sshll.u32 %s237, 4
          %s245 = int_to_ptr.vmem [resolvable:$true] %s244
          %247 = dma.hbm_to_vmem [thread:$0]  %s242, 128, %s245, %s234
        $region40: #{tpu_custom_call.1} parent=35 // pred_fallthru
          _
      $region36: #{tpu_custom_call.1} parent=5 // pred_fallthru
        _
      %p248 = scmp.le.s32.totalorder 1, %s19
      %p249 = scmp.lt.s32.totalorder %s19, 3
      %p250 = pnand %p248, %p249
      %p251 = pneg %p250
      // Predicated region
      $region41: #{tpu_custom_call.1} parent=5 // pred_check
        _
      $region42: #{tpu_custom_call.1} parent=5 // pred_check_branch
        %253 = sbr.rel (%p250) target = $region44
      $region43: #{tpu_custom_call.1} parent=5 // pred_region
        %s254 = ssub.s32 %s19, 1
        %s255 = sand.u32 %s32, 1
        %s256 = scalar_lea.sflag [#allocation4], %s255
        %s257 = sand.u32 %s32, 1
        %s258 = smul.addr %s257, 8
        %s259 = scalar_lea.vmem [#allocation3], %s258
        // Predicated region
        $region45: #{tpu_custom_call.1} parent=43 // pred_check
          %p260 = pneg %p45
        $region46: #{tpu_custom_call.1} parent=43 // pred_check_branch
          %262 = sbr.rel (%p260) target = $region48
        $region47: #{tpu_custom_call.1} parent=43 // pred_region
          %263 = dma.done %s256, 128
        $region48: #{tpu_custom_call.1} parent=43 // pred_fallthru
          _
        // Predicated region
        $region49: #{tpu_custom_call.1} parent=43 // pred_check
          %p264 = pneg %p66
        $region50: #{tpu_custom_call.1} parent=43 // pred_check_branch
          %266 = sbr.rel (%p264) target = $region52
        $region51: #{tpu_custom_call.1} parent=43 // pred_region
          %267 = dma.done [#allocation7], 256
        $region52: #{tpu_custom_call.1} parent=43 // pred_fallthru
          _
        // Predicated region
        $region53: #{tpu_custom_call.1} parent=43 // pred_check
          %p268 = pneg %p108
        $region54: #{tpu_custom_call.1} parent=43 // pred_check_branch
          %270 = sbr.rel (%p268) target = $region56
        $region55: #{tpu_custom_call.1} parent=43 // pred_region
          %271 = dma.done [#allocation7], 256
        $region56: #{tpu_custom_call.1} parent=43 // pred_fallthru
          _
        %s272 = sand.u32 %s32, 1
        %s273 = scalar_lea.sflag [#allocation4], %s272
        %s274 = sand.u32 %s32, 1
        %s275 = smul.addr %s274, 8
        %s276 = scalar_lea.vmem [#allocation3], %s275
        %p277 = pneg %p45
        %p278 = pneg %p42
        %p279 = pneg %p66
        %p280 = pneg %p63
        %p281 = pneg %p87
        %p282 = pneg %p84
        %p283 = pneg %p108
        %p284 = pneg %p105
        %p285 = pneg %p129
        %p286 = pneg %p126
        %p287 = pneg %p150
        %p288 = pneg %p147
        %p289 = pneg %p176
        %p290 = pneg %p173
        %s291 = sand.u32 %s163, 1
        %s292 = scalar_lea.sflag [#allocation5], %s291
        %s293 = sand.u32 %s163, 1
        %s294 = smul.addr %s293, 8
        %s295 = scalar_lea.vmem [#allocation9], %s294
        %v297 = vld [vmem:[%s259] sm:$0xff]
        %v298 = vpack.c.bf16 %v297, %v297
        %v299 = vld [vmem:[#allocation6] sm:$0xf]
        %v300 = vld [vmem:[#allocation6 + $0x4] sm:$0xf]
        %v301 = vld [vmem:[#allocation6 + $0x8] sm:$0xf]
        %v302 = vld [vmem:[#allocation6 + $0xc] sm:$0xf]
        %v303 = vld [vmem:[%s2] sm:$0x1]
        %v305 = vlaneseq
        %v306 = vshrl.u32 %v305, 7
        %v307 = vsub.s32 0, %v306
        %v308 = vrot.slane %v303, %v307
        %v314 = vunpack.c.l.b16 %v299
        %v315 = vunpack.c.l.b16 %v300
        %v316 = vunpack.c.l.b16 %v301
        %v317 = vunpack.c.l.b16 %v302
        %v318 = vpack.c.b16 %v315, %v314
        %v319 = vpack.c.b16 %v317, %v316
        %vm322 = vcmask 261120
        %v324 = vsel %vm322, %v298, 0
        %326 = vmatprep.subr.bf16.mxu0 0
        %327 = vmatpush1.bf16.msra.mxu0 %v318
        %328 = vmatprep.subr.bf16.mxu0 0
        %329 = vmatpush1.bf16.msra.mxu0 %v319
        %330 = vmatprep.subr.bf16.mxu0 0
        %331 = vmatpush1.bf16.msra.mxu0 0
        %332 = vmatprep.subr.bf16.mxu0 0
        %333 = vmatpush1.bf16.msra.mxu0 0
        %334 = vmatprep.subr.bf16.mxu0 0
        %335 = vmatpush1.bf16.msra.mxu0 0
        %336 = vmatprep.subr.bf16.mxu0 0
        %337 = vmatpush1.bf16.msra.mxu0 0
        %338 = vmatprep.subr.bf16.mxu0 0
        %339 = vmatpush1.bf16.msra.mxu0 0
        %340 = vmatprep.subr.bf16.mxu0 0
        %341 = vmatpush1.bf16.msra.mxu0 0
        %342 = vmatprep.subr.bf16.mxu0 0
        %343 = vmatpush1.bf16.msra.mxu0 0
        %344 = vmatprep.subr.bf16.mxu0 0
        %345 = vmatpush1.bf16.msra.mxu0 0
        %346 = vmatprep.subr.bf16.mxu0 0
        %347 = vmatpush1.bf16.msra.mxu0 0
        %348 = vmatprep.subr.bf16.mxu0 0
        %349 = vmatpush1.bf16.msra.mxu0 0
        %350 = vmatprep.subr.bf16.mxu0 0
        %351 = vmatpush1.bf16.msra.mxu0 0
        %352 = vmatprep.subr.bf16.mxu0 0
        %353 = vmatpush1.bf16.msra.mxu0 0
        %354 = vmatprep.subr.bf16.mxu0 0
        %355 = vmatpush1.bf16.msra.mxu0 0
        %356 = vmatprep.subr.bf16.mxu0 0
        %357 = vmatpush1.bf16.msra.mxu0 0
        %358 = vmatprep.mubr.bf16.mxu0 0
        %359 = vmatmul.mubr.bf16.gmra.mrb[0].mxu0 %v324
        %v360 = vpop.f32.mrb[0].mxu0
        %v361 = vadd.f32 %v308, %v360
        %v362 = vpop.f32.mrb[0].mxu0
        %v363 = vpop.f32.mrb[0].mxu0
        %v364 = vpop.f32.mrb[0].mxu0
        %365 = vdwg.mxu0
        %v366 = vld [vmem:[%s5] sm:$0xff]
        %v367 = vpack.c.bf16 %v361, %v361
        %369 = vrot.lane.b32.xlu0 %v367, 96
        %v370 = vpop.permute.xlu0 %369
        %vm371 = vcmask 64512
        %v373 = vsel %vm371, %v367, 0
        %v376 = vsel %vm371, %v370, 0
        %378 = vmatprep.subr.bf16.mxu0 0
        %379 = vmatpush1.bf16.xpose.msra.mxu0 %v376
        %380 = vmatprep.subr.bf16.mxu0 0
        %381 = vmatpush1.bf16.xpose.msra.mxu0 0
        %382 = vmatprep.subr.bf16.mxu0 0
        %383 = vmatpush1.bf16.xpose.msra.mxu0 0
        %384 = vmatprep.subr.bf16.mxu0 0
        %385 = vmatpush1.bf16.xpose.msra.mxu0 0
        %386 = vmatprep.subr.bf16.mxu0 0
        %387 = vmatpush1.bf16.xpose.msra.mxu0 0
        %388 = vmatprep.subr.bf16.mxu0 0
        %389 = vmatpush1.bf16.xpose.msra.mxu0 0
        %390 = vmatprep.subr.bf16.mxu0 0
        %391 = vmatpush1.bf16.xpose.msra.mxu0 0
        %392 = vmatprep.subr.bf16.mxu0 0
        %393 = vmatpush1.bf16.xpose.msra.mxu0 0
        %394 = vmatprep.subr.bf16.mxu0 0
        %395 = vmatpush1.bf16.xpose.msra.mxu0 0
        %396 = vmatprep.subr.bf16.mxu0 0
        %397 = vmatpush1.bf16.xpose.msra.mxu0 0
        %398 = vmatprep.subr.bf16.mxu0 0
        %399 = vmatpush1.bf16.xpose.msra.mxu0 0
        %400 = vmatprep.subr.bf16.mxu0 0
        %401 = vmatpush1.bf16.xpose.msra.mxu0 0
        %402 = vmatprep.subr.bf16.mxu0 0
        %403 = vmatpush1.bf16.xpose.msra.mxu0 0
        %404 = vmatprep.subr.bf16.mxu0 0
        %405 = vmatpush1.bf16.xpose.msra.mxu0 0
        %406 = vmatprep.subr.bf16.mxu0 0
        %407 = vmatpush1.bf16.xpose.msra.mxu0 0
        %408 = vmatprep.subr.bf16.mxu0 0
        %409 = vmatpush1.bf16.xpose.msra.mxu0 0
        %410 = vmatprep.mubr.bf16.mxu0 0
        %411 = vmatmul.mubr.bf16.gmra.mrb[0].mxu0 %v373
        %v412 = vpop.f32.mrb[0].mxu0
        %v413 = vadd.f32 %v366, %v412
        %v414 = vpop.f32.mrb[0].mxu0
        %v415 = vpop.f32.mrb[0].mxu0
        %v416 = vpop.f32.mrb[0].mxu0
        %417 = vdwg.mxu0
        %v418 = vsel %vm371, %v413, -inf
        %419 = vmax.xlane.f32.xlu0 %v418
        %v420 = vpop.xlane.xlu0 %419
        %v421 = vsub.f32 %v413, %v420
        %v422 = vmul.f32 %v421, 1.442695
        %v423 = vpow.pop %v422
        %v424 = vsel %vm371, %v423, 0.0
        %425 = vadd.xlane.f32.xlu0 %v424
        %v426 = vpop.xlane.xlu0 %425
        %v427 = vrcp.pop %v426
        %v428 = vmul.f32 %v423, %v427
        %v429 = vpack.c.bf16 %v428, %v428
        %430 = vrot.lane.b32.xlu0 %v367, 64
        %v431 = vpop.permute.xlu0 %430
        %v433 = vsel %vm371, %v429, 0
        %vm435 = vcmask 1043456
        %v437 = vsel %vm435, %v431, 0
        %439 = vmatprep.subr.bf16.mxu0 0
        %440 = vmatpush1.bf16.msra.mxu0 %v437
        %441 = vmatprep.subr.bf16.mxu0 0
        %442 = vmatpush1.bf16.msra.mxu0 0
        %443 = vmatprep.subr.bf16.mxu0 0
        %444 = vmatpush1.bf16.msra.mxu0 0
        %445 = vmatprep.subr.bf16.mxu0 0
        %446 = vmatpush1.bf16.msra.mxu0 0
        %447 = vmatprep.subr.bf16.mxu0 0
        %448 = vmatpush1.bf16.msra.mxu0 0
        %449 = vmatprep.subr.bf16.mxu0 0
        %450 = vmatpush1.bf16.msra.mxu0 0
        %451 = vmatprep.subr.bf16.mxu0 0
        %452 = vmatpush1.bf16.msra.mxu0 0
        %453 = vmatprep.subr.bf16.mxu0 0
        %454 = vmatpush1.bf16.msra.mxu0 0
        %455 = vmatprep.subr.bf16.mxu0 0
        %456 = vmatpush1.bf16.msra.mxu0 0
        %457 = vmatprep.subr.bf16.mxu0 0
        %458 = vmatpush1.bf16.msra.mxu0 0
        %459 = vmatprep.subr.bf16.mxu0 0
        %460 = vmatpush1.bf16.msra.mxu0 0
        %461 = vmatprep.subr.bf16.mxu0 0
        %462 = vmatpush1.bf16.msra.mxu0 0
        %463 = vmatprep.subr.bf16.mxu0 0
        %464 = vmatpush1.bf16.msra.mxu0 0
        %465 = vmatprep.subr.bf16.mxu0 0
        %466 = vmatpush1.bf16.msra.mxu0 0
        %467 = vmatprep.subr.bf16.mxu0 0
        %468 = vmatpush1.bf16.msra.mxu0 0
        %469 = vmatprep.subr.bf16.mxu0 0
        %470 = vmatpush1.bf16.msra.mxu0 0
        %471 = vmatprep.mubr.bf16.mxu0 0
        %472 = vmatmul.mubr.bf16.gmra.mrb[0].mxu0 %v433
        %v473 = vpop.f32.mrb[0].mxu0
        %v474 = vadd.f32 0.0, %v473
        %v475 = vpop.f32.mrb[0].mxu0
        %v476 = vpop.f32.mrb[0].mxu0
        %v477 = vpop.f32.mrb[0].mxu0
        %478 = vdwg.mxu0
        %479 = vst.msk [vmem:[#allocation2] sm:$0xff] %vm371, %v474
        %480 = vrot.lane.b32.xlu0 %v367, 120
        %v481 = vpop.permute.xlu0 %480
        %482 = vrot.lane.b32.xlu0 %v367, 88
        %v483 = vpop.permute.xlu0 %482
        %v485 = vsel %vm371, %v481, 0
        %v488 = vsel %vm371, %v483, 0
        %490 = vmatprep.subr.bf16.mxu0 0
        %491 = vmatpush1.bf16.xpose.msra.mxu0 %v488
        %492 = vmatprep.subr.bf16.mxu0 0
        %493 = vmatpush1.bf16.xpose.msra.mxu0 0
        %494 = vmatprep.subr.bf16.mxu0 0
        %495 = vmatpush1.bf16.xpose.msra.mxu0 0
        %496 = vmatprep.subr.bf16.mxu0 0
        %497 = vmatpush1.bf16.xpose.msra.mxu0 0
        %498 = vmatprep.subr.bf16.mxu0 0
        %499 = vmatpush1.bf16.xpose.msra.mxu0 0
        %500 = vmatprep.subr.bf16.mxu0 0
        %501 = vmatpush1.bf16.xpose.msra.mxu0 0
        %502 = vmatprep.subr.bf16.mxu0 0
        %503 = vmatpush1.bf16.xpose.msra.mxu0 0
        %504 = vmatprep.subr.bf16.mxu0 0
        %505 = vmatpush1.bf16.xpose.msra.mxu0 0
        %506 = vmatprep.subr.bf16.mxu0 0
        %507 = vmatpush1.bf16.xpose.msra.mxu0 0
        %508 = vmatprep.subr.bf16.mxu0 0
        %509 = vmatpush1.bf16.xpose.msra.mxu0 0
        %510 = vmatprep.subr.bf16.mxu0 0
        %511 = vmatpush1.bf16.xpose.msra.mxu0 0
        %512 = vmatprep.subr.bf16.mxu0 0
        %513 = vmatpush1.bf16.xpose.msra.mxu0 0
        %514 = vmatprep.subr.bf16.mxu0 0
        %515 = vmatpush1.bf16.xpose.msra.mxu0 0
        %516 = vmatprep.subr.bf16.mxu0 0
        %517 = vmatpush1.bf16.xpose.msra.mxu0 0
        %518 = vmatprep.subr.bf16.mxu0 0
        %519 = vmatpush1.bf16.xpose.msra.mxu0 0
        %520 = vmatprep.subr.bf16.mxu0 0
        %521 = vmatpush1.bf16.xpose.msra.mxu0 0
        %522 = vmatprep.mubr.bf16.mxu0 0
        %523 = vmatmul.mubr.bf16.gmra.mrb[0].mxu0 %v485
        %v524 = vpop.f32.mrb[0].mxu0
        %v525 = vadd.f32 %v366, %v524
        %v526 = vpop.f32.mrb[0].mxu0
        %v527 = vpop.f32.mrb[0].mxu0
        %v528 = vpop.f32.mrb[0].mxu0
        %529 = vdwg.mxu0
        %v530 = vsel %vm371, %v525, -inf
        %531 = vmax.xlane.f32.xlu0 %v530
        %v532 = vpop.xlane.xlu0 %531
        %v533 = vsub.f32 %v525, %v532
        %v534 = vmul.f32 %v533, 1.442695
        %v535 = vpow.pop %v534
        %v536 = vsel %vm371, %v535, 0.0
        %537 = vadd.xlane.f32.xlu0 %v536
        %v538 = vpop.xlane.xlu0 %537
        %v539 = vrcp.pop %v538
        %v540 = vmul.f32 %v535, %v539
        %v541 = vpack.c.bf16 %v540, %v540
        %542 = vrot.lane.b32.xlu0 %v367, 56
        %v543 = vpop.permute.xlu0 %542
        %v545 = vsel %vm371, %v541, 0
        %v548 = vsel %vm435, %v543, 0
        %550 = vmatprep.subr.bf16.mxu0 0
        %551 = vmatpush1.bf16.msra.mxu0 %v548
        %552 = vmatprep.subr.bf16.mxu0 0
        %553 = vmatpush1.bf16.msra.mxu0 0
        %554 = vmatprep.subr.bf16.mxu0 0
        %555 = vmatpush1.bf16.msra.mxu0 0
        %556 = vmatprep.subr.bf16.mxu0 0
        %557 = vmatpush1.bf16.msra.mxu0 0
        %558 = vmatprep.subr.bf16.mxu0 0
        %559 = vmatpush1.bf16.msra.mxu0 0
        %560 = vmatprep.subr.bf16.mxu0 0
        %561 = vmatpush1.bf16.msra.mxu0 0
        %562 = vmatprep.subr.bf16.mxu0 0
        %563 = vmatpush1.bf16.msra.mxu0 0
        %564 = vmatprep.subr.bf16.mxu0 0
        %565 = vmatpush1.bf16.msra.mxu0 0
        %566 = vmatprep.subr.bf16.mxu0 0
        %567 = vmatpush1.bf16.msra.mxu0 0
        %568 = vmatprep.subr.bf16.mxu0 0
        %569 = vmatpush1.bf16.msra.mxu0 0
        %570 = vmatprep.subr.bf16.mxu0 0
        %571 = vmatpush1.bf16.msra.mxu0 0
        %572 = vmatprep.subr.bf16.mxu0 0
        %573 = vmatpush1.bf16.msra.mxu0 0
        %574 = vmatprep.subr.bf16.mxu0 0
        %575 = vmatpush1.bf16.msra.mxu0 0
        %576 = vmatprep.subr.bf16.mxu0 0
        %577 = vmatpush1.bf16.msra.mxu0 0
        %578 = vmatprep.subr.bf16.mxu0 0
        %579 = vmatpush1.bf16.msra.mxu0 0
        %580 = vmatprep.subr.bf16.mxu0 0
        %581 = vmatpush1.bf16.msra.mxu0 0
        %582 = vmatprep.mubr.bf16.mxu0 0
        %583 = vmatmul.mubr.bf16.gmra.mrb[0].mxu0 %v545
        %v584 = vpop.f32.mrb[0].mxu0
        %v585 = vadd.f32 0.0, %v584
        %v586 = vpop.f32.mrb[0].mxu0
        %v587 = vpop.f32.mrb[0].mxu0
        %v588 = vpop.f32.mrb[0].mxu0
        %589 = vdwg.mxu0
        %591 = vrot.lane.b32.xlu0 %v585, 8
        %v592 = vpop.permute.xlu0 %591
        %vm594 = vcmask 130112
        %595 = vst.msk [vmem:[#allocation2] sm:$0xff] %vm594, %v592
        %596 = vrot.lane.b32.xlu0 %v367, 112
        %v597 = vpop.permute.xlu0 %596
        %598 = vrot.lane.b32.xlu0 %v367, 80
        %v599 = vpop.permute.xlu0 %598
        %v601 = vsel %vm371, %v597, 0
        %v604 = vsel %vm371, %v599, 0
        %606 = vmatprep.subr.bf16.mxu0 0
        %607 = vmatpush1.bf16.xpose.msra.mxu0 %v604
        %608 = vmatprep.subr.bf16.mxu0 0
        %609 = vmatpush1.bf16.xpose.msra.mxu0 0
        %610 = vmatprep.subr.bf16.mxu0 0
        %611 = vmatpush1.bf16.xpose.msra.mxu0 0
        %612 = vmatprep.subr.bf16.mxu0 0
        %613 = vmatpush1.bf16.xpose.msra.mxu0 0
        %614 = vmatprep.subr.bf16.mxu0 0
        %615 = vmatpush1.bf16.xpose.msra.mxu0 0
        %616 = vmatprep.subr.bf16.mxu0 0
        %617 = vmatpush1.bf16.xpose.msra.mxu0 0
        %618 = vmatprep.subr.bf16.mxu0 0
        %619 = vmatpush1.bf16.xpose.msra.mxu0 0
        %620 = vmatprep.subr.bf16.mxu0 0
        %621 = vmatpush1.bf16.xpose.msra.mxu0 0
        %622 = vmatprep.subr.bf16.mxu0 0
        %623 = vmatpush1.bf16.xpose.msra.mxu0 0
        %624 = vmatprep.subr.bf16.mxu0 0
        %625 = vmatpush1.bf16.xpose.msra.mxu0 0
        %626 = vmatprep.subr.bf16.mxu0 0
        %627 = vmatpush1.bf16.xpose.msra.mxu0 0
        %628 = vmatprep.subr.bf16.mxu0 0
        %629 = vmatpush1.bf16.xpose.msra.mxu0 0
        %630 = vmatprep.subr.bf16.mxu0 0
        %631 = vmatpush1.bf16.xpose.msra.mxu0 0
        %632 = vmatprep.subr.bf16.mxu0 0
        %633 = vmatpush1.bf16.xpose.msra.mxu0 0
        %634 = vmatprep.subr.bf16.mxu0 0
        %635 = vmatpush1.bf16.xpose.msra.mxu0 0
        %636 = vmatprep.subr.bf16.mxu0 0
        %637 = vmatpush1.bf16.xpose.msra.mxu0 0
        %638 = vmatprep.mubr.bf16.mxu0 0
        %639 = vmatmul.mubr.bf16.gmra.mrb[0].mxu0 %v601
        %v640 = vpop.f32.mrb[0].mxu0
        %v641 = vadd.f32 %v366, %v640
        %v642 = vpop.f32.mrb[0].mxu0
        %v643 = vpop.f32.mrb[0].mxu0
        %v644 = vpop.f32.mrb[0].mxu0
        %645 = vdwg.mxu0
        %v646 = vsel %vm371, %v641, -inf
        %647 = vmax.xlane.f32.xlu0 %v646
        %v648 = vpop.xlane.xlu0 %647
        %v649 = vsub.f32 %v641, %v648
        %v650 = vmul.f32 %v649, 1.442695
        %v651 = vpow.pop %v650
        %v652 = vsel %vm371, %v651, 0.0
        %653 = vadd.xlane.f32.xlu0 %v652
        %v654 = vpop.xlane.xlu0 %653
        %v655 = vrcp.pop %v654
        %v656 = vmul.f32 %v651, %v655
        %v657 = vpack.c.bf16 %v656, %v656
        %658 = vrot.lane.b32.xlu0 %v367, 48
        %v659 = vpop.permute.xlu0 %658
        %v661 = vsel %vm371, %v657, 0
        %v664 = vsel %vm435, %v659, 0
        %666 = vmatprep.subr.bf16.mxu0 0
        %667 = vmatpush1.bf16.msra.mxu0 %v664
        %668 = vmatprep.subr.bf16.mxu0 0
        %669 = vmatpush1.bf16.msra.mxu0 0
        %670 = vmatprep.subr.bf16.mxu0 0
        %671 = vmatpush1.bf16.msra.mxu0 0
        %672 = vmatprep.subr.bf16.mxu0 0
        %673 = vmatpush1.bf16.msra.mxu0 0
        %674 = vmatprep.subr.bf16.mxu0 0
        %675 = vmatpush1.bf16.msra.mxu0 0
        %676 = vmatprep.subr.bf16.mxu0 0
        %677 = vmatpush1.bf16.msra.mxu0 0
        %678 = vmatprep.subr.bf16.mxu0 0
        %679 = vmatpush1.bf16.msra.mxu0 0
        %680 = vmatprep.subr.bf16.mxu0 0
        %681 = vmatpush1.bf16.msra.mxu0 0
        %682 = vmatprep.subr.bf16.mxu0 0
        %683 = vmatpush1.bf16.msra.mxu0 0
        %684 = vmatprep.subr.bf16.mxu0 0
        %685 = vmatpush1.bf16.msra.mxu0 0
        %686 = vmatprep.subr.bf16.mxu0 0
        %687 = vmatpush1.bf16.msra.mxu0 0
        %688 = vmatprep.subr.bf16.mxu0 0
        %689 = vmatpush1.bf16.msra.mxu0 0
        %690 = vmatprep.subr.bf16.mxu0 0
        %691 = vmatpush1.bf16.msra.mxu0 0
        %692 = vmatprep.subr.bf16.mxu0 0
        %693 = vmatpush1.bf16.msra.mxu0 0
        %694 = vmatprep.subr.bf16.mxu0 0
        %695 = vmatpush1.bf16.msra.mxu0 0
        %696 = vmatprep.subr.bf16.mxu0 0
        %697 = vmatpush1.bf16.msra.mxu0 0
        %698 = vmatprep.mubr.bf16.mxu0 0
        %699 = vmatmul.mubr.bf16.gmra.mrb[0].mxu0 %v661
        %v700 = vpop.f32.mrb[0].mxu0
        %v701 = vadd.f32 0.0, %v700
        %v702 = vpop.f32.mrb[0].mxu0
        %v703 = vpop.f32.mrb[0].mxu0
        %v704 = vpop.f32.mrb[0].mxu0
        %705 = vdwg.mxu0
        %707 = vrot.lane.b32.xlu0 %v701, 16
        %v708 = vpop.permute.xlu0 %707
        %vm710 = vcmask 195712
        %711 = vst.msk [vmem:[#allocation2] sm:$0xff] %vm710, %v708
        %712 = vrot.lane.b32.xlu0 %v367, 104
        %v713 = vpop.permute.xlu0 %712
        %714 = vrot.lane.b32.xlu0 %v367, 72
        %v715 = vpop.permute.xlu0 %714
        %v717 = vsel %vm371, %v713, 0
        %v720 = vsel %vm371, %v715, 0
        %722 = vmatprep.subr.bf16.mxu0 0
        %723 = vmatpush1.bf16.xpose.msra.mxu0 %v720
        %724 = vmatprep.subr.bf16.mxu0 0
        %725 = vmatpush1.bf16.xpose.msra.mxu0 0
        %726 = vmatprep.subr.bf16.mxu0 0
        %727 = vmatpush1.bf16.xpose.msra.mxu0 0
        %728 = vmatprep.subr.bf16.mxu0 0
        %729 = vmatpush1.bf16.xpose.msra.mxu0 0
        %730 = vmatprep.subr.bf16.mxu0 0
        %731 = vmatpush1.bf16.xpose.msra.mxu0 0
        %732 = vmatprep.subr.bf16.mxu0 0
        %733 = vmatpush1.bf16.xpose.msra.mxu0 0
        %734 = vmatprep.subr.bf16.mxu0 0
        %735 = vmatpush1.bf16.xpose.msra.mxu0 0
        %736 = vmatprep.subr.bf16.mxu0 0
        %737 = vmatpush1.bf16.xpose.msra.mxu0 0
        %738 = vmatprep.subr.bf16.mxu0 0
        %739 = vmatpush1.bf16.xpose.msra.mxu0 0
        %740 = vmatprep.subr.bf16.mxu0 0
        %741 = vmatpush1.bf16.xpose.msra.mxu0 0
        %742 = vmatprep.subr.bf16.mxu0 0
        %743 = vmatpush1.bf16.xpose.msra.mxu0 0
        %744 = vmatprep.subr.bf16.mxu0 0
        %745 = vmatpush1.bf16.xpose.msra.mxu0 0
        %746 = vmatprep.subr.bf16.mxu0 0
        %747 = vmatpush1.bf16.xpose.msra.mxu0 0
        %748 = vmatprep.subr.bf16.mxu0 0
        %749 = vmatpush1.bf16.xpose.msra.mxu0 0
        %750 = vmatprep.subr.bf16.mxu0 0
        %751 = vmatpush1.bf16.xpose.msra.mxu0 0
        %752 = vmatprep.subr.bf16.mxu0 0
        %753 = vmatpush1.bf16.xpose.msra.mxu0 0
        %754 = vmatprep.mubr.bf16.mxu0 0
        %755 = vmatmul.mubr.bf16.gmra.mrb[0].mxu0 %v717
        %v756 = vpop.f32.mrb[0].mxu0
        %v757 = vadd.f32 %v366, %v756
        %v758 = vpop.f32.mrb[0].mxu0
        %v759 = vpop.f32.mrb[0].mxu0
        %v760 = vpop.f32.mrb[0].mxu0
        %761 = vdwg.mxu0
        %v762 = vsel %vm371, %v757, -inf
        %763 = vmax.xlane.f32.xlu0 %v762
        %v764 = vpop.xlane.xlu0 %763
        %v765 = vsub.f32 %v757, %v764
        %v766 = vmul.f32 %v765, 1.442695
        %v767 = vpow.pop %v766
        %v768 = vsel %vm371, %v767, 0.0
        %769 = vadd.xlane.f32.xlu0 %v768
        %v770 = vpop.xlane.xlu0 %769
        %v771 = vrcp.pop %v770
        %v772 = vmul.f32 %v767, %v771
        %v773 = vpack.c.bf16 %v772, %v772
        %774 = vrot.lane.b32.xlu0 %v367, 40
        %v775 = vpop.permute.xlu0 %774
        %v777 = vsel %vm371, %v773, 0
        %v780 = vsel %vm435, %v775, 0
        %782 = vmatprep.subr.bf16.mxu0 0
        %783 = vmatpush1.bf16.msra.mxu0 %v780
        %784 = vmatprep.subr.bf16.mxu0 0
        %785 = vmatpush1.bf16.msra.mxu0 0
        %786 = vmatprep.subr.bf16.mxu0 0
        %787 = vmatpush1.bf16.msra.mxu0 0
        %788 = vmatprep.subr.bf16.mxu0 0
        %789 = vmatpush1.bf16.msra.mxu0 0
        %790 = vmatprep.subr.bf16.mxu0 0
        %791 = vmatpush1.bf16.msra.mxu0 0
        %792 = vmatprep.subr.bf16.mxu0 0
        %793 = vmatpush1.bf16.msra.mxu0 0
        %794 = vmatprep.subr.bf16.mxu0 0
        %795 = vmatpush1.bf16.msra.mxu0 0
        %796 = vmatprep.subr.bf16.mxu0 0
        %797 = vmatpush1.bf16.msra.mxu0 0
        %798 = vmatprep.subr.bf16.mxu0 0
        %799 = vmatpush1.bf16.msra.mxu0 0
        %800 = vmatprep.subr.bf16.mxu0 0
        %801 = vmatpush1.bf16.msra.mxu0 0
        %802 = vmatprep.subr.bf16.mxu0 0
        %803 = vmatpush1.bf16.msra.mxu0 0
        %804 = vmatprep.subr.bf16.mxu0 0
        %805 = vmatpush1.bf16.msra.mxu0 0
        %806 = vmatprep.subr.bf16.mxu0 0
        %807 = vmatpush1.bf16.msra.mxu0 0
        %808 = vmatprep.subr.bf16.mxu0 0
        %809 = vmatpush1.bf16.msra.mxu0 0
        %810 = vmatprep.subr.bf16.mxu0 0
        %811 = vmatpush1.bf16.msra.mxu0 0
        %812 = vmatprep.subr.bf16.mxu0 0
        %813 = vmatpush1.bf16.msra.mxu0 0
        %814 = vmatprep.mubr.bf16.mxu0 0
        %815 = vmatmul.mubr.bf16.gmra.mrb[0].mxu0 %v777
        %v816 = vpop.f32.mrb[0].mxu0
        %v817 = vadd.f32 0.0, %v816
        %v818 = vpop.f32.mrb[0].mxu0
        %v819 = vpop.f32.mrb[0].mxu0
        %v820 = vpop.f32.mrb[0].mxu0
        %821 = vdwg.mxu0
        %823 = vrot.lane.b32.xlu0 %v817, 24
        %v824 = vpop.permute.xlu0 %823
        %vm826 = vcmask 261312
        %827 = vst.msk [vmem:[#allocation2] sm:$0xff] %vm826, %v824
        %v828 = vld [vmem:[#allocation2] sm:$0xff]
        %v829 = vpack.c.bf16 %v828, %v828
        %v830 = vld [vmem:[#allocation8] sm:$0xf]
        %v831 = vld [vmem:[#allocation8 + $0x4] sm:$0xf]
        %v832 = vld [vmem:[#allocation8 + $0x8] sm:$0xf]
        %v833 = vld [vmem:[#allocation8 + $0xc] sm:$0xf]
        %v834 = vld [vmem:[%s4] sm:$0x1]
        %v836 = vlaneseq
        %v837 = vshrl.u32 %v836, 7
        %v838 = vsub.s32 0, %v837
        %v839 = vrot.slane %v834, %v838
        %v845 = vunpack.c.l.b16 %v830
        %v846 = vunpack.c.l.b16 %v831
        %v847 = vunpack.c.l.b16 %v832
        %v848 = vunpack.c.l.b16 %v833
        %v849 = vpack.c.b16 %v846, %v845
        %v850 = vpack.c.b16 %v848, %v847
        %v854 = vsel %vm322, %v829, 0
        %856 = vmatprep.subr.bf16.mxu0 0
        %857 = vmatpush1.bf16.msra.mxu0 %v849
        %858 = vmatprep.subr.bf16.mxu0 0
        %859 = vmatpush1.bf16.msra.mxu0 %v850
        %860 = vmatprep.subr.bf16.mxu0 0
        %861 = vmatpush1.bf16.msra.mxu0 0
        %862 = vmatprep.subr.bf16.mxu0 0
        %863 = vmatpush1.bf16.msra.mxu0 0
        %864 = vmatprep.subr.bf16.mxu0 0
        %865 = vmatpush1.bf16.msra.mxu0 0
        %866 = vmatprep.subr.bf16.mxu0 0
        %867 = vmatpush1.bf16.msra.mxu0 0
        %868 = vmatprep.subr.bf16.mxu0 0
        %869 = vmatpush1.bf16.msra.mxu0 0
        %870 = vmatprep.subr.bf16.mxu0 0
        %871 = vmatpush1.bf16.msra.mxu0 0
        %872 = vmatprep.subr.bf16.mxu0 0
        %873 = vmatpush1.bf16.msra.mxu0 0
        %874 = vmatprep.subr.bf16.mxu0 0
        %875 = vmatpush1.bf16.msra.mxu0 0
        %876 = vmatprep.subr.bf16.mxu0 0
        %877 = vmatpush1.bf16.msra.mxu0 0
        %878 = vmatprep.subr.bf16.mxu0 0
        %879 = vmatpush1.bf16.msra.mxu0 0
        %880 = vmatprep.subr.bf16.mxu0 0
        %881 = vmatpush1.bf16.msra.mxu0 0
        %882 = vmatprep.subr.bf16.mxu0 0
        %883 = vmatpush1.bf16.msra.mxu0 0
        %884 = vmatprep.subr.bf16.mxu0 0
        %885 = vmatpush1.bf16.msra.mxu0 0
        %886 = vmatprep.subr.bf16.mxu0 0
        %887 = vmatpush1.bf16.msra.mxu0 0
        %888 = vmatprep.mubr.bf16.mxu0 0
        %889 = vmatmul.mubr.bf16.gmra.mrb[0].mxu0 %v854
        %v890 = vpop.f32.mrb[0].mxu0
        %v891 = vadd.f32 %v839, %v890
        %v892 = vpop.f32.mrb[0].mxu0
        %v893 = vpop.f32.mrb[0].mxu0
        %v894 = vpop.f32.mrb[0].mxu0
        %895 = vdwg.mxu0
        %896 = vst.msk [vmem:[%s295] sm:$0xff] %vm322, %v891
        %s897 = sand.u32 %s163, 1
        %s898 = scalar_lea.sflag [#allocation5], %s897
        %s899 = sand.u32 %s163, 1
        %s900 = smul.addr %s899, 8
        %s901 = scalar_lea.vmem [#allocation9], %s900
        // Predicated region
        $region57: #{tpu_custom_call.1} parent=43 // pred_check
          %p902 = pneg %p173
        $region58: #{tpu_custom_call.1} parent=43 // pred_check_branch
          %904 = sbr.rel (%p902) target = $region60
        $region59: #{tpu_custom_call.1} parent=43 // pred_region
          %s906 = ssub.s32 128, 128
          %907 = vsyncadd %s898, %s906
          %s908 = smul.addr %s24, 128
          %s909 = scalar_lea.hbm %s6, %s908
          %s911 = sshll.u32 %s901, 4
          %s912 = int_to_ptr.vmem [resolvable:$true] %s911
          %914 = dma.vmem_to_hbm [thread:$0]  %s912, 128, %s909, %s898
        $region60: #{tpu_custom_call.1} parent=43 // pred_fallthru
          _
      $region44: #{tpu_custom_call.1} parent=5 // pred_fallthru
        _
      %p915 = scmp.le.s32.totalorder 2, %s19
      // Predicated region
      $region61: #{tpu_custom_call.1} parent=5 // pred_check
        %p916 = pneg %p915
      $region62: #{tpu_custom_call.1} parent=5 // pred_check_branch
        %918 = sbr.rel (%p916) target = $region64
      $region63: #{tpu_custom_call.1} parent=5 // pred_region
        %s919 = ssub.s32 %s19, 2
        // Predicated region
        $region65: #{tpu_custom_call.1} parent=63 // pred_check
          %p920 = pneg %p179
        $region66: #{tpu_custom_call.1} parent=63 // pred_check_branch
          %922 = sbr.rel (%p920) target = $region68
        $region67: #{tpu_custom_call.1} parent=63 // pred_region
          %s923 = sand.u32 %s164, 1
          %s924 = scalar_lea.sflag [#allocation5], %s923
          %s925 = sand.u32 %s164, 1
          %s926 = smul.addr %s925, 8
          %s927 = scalar_lea.vmem [#allocation9], %s926
          %928 = dma.done %s924, 128
        $region68: #{tpu_custom_call.1} parent=63 // pred_fallthru
          _
      $region64: #{tpu_custom_call.1} parent=5 // pred_fallthru
        _
    $region6: #{tpu_custom_call.1} parent=1 // loop_footer
      %s23 = sadd.s32 1, %s19
    $region7: #{tpu_custom_call.1} parent=1 // loop_footer_branch
      %18 = sbr.rel target = $region3
    $region8: #{tpu_custom_call.1} parent=1 // loop_exit
      _
    %929 = vsyncpa [#allocation4], 1
    %s930 = scalar_lea.sflag [#allocation4], 1
    %931 = vsyncpa %s930, 1
    %932 = vsyncpa [#allocation7], 1
    %933 = vsyncpa [#allocation5], 1
    %s934 = scalar_lea.sflag [#allocation5], 1
    %935 = vsyncpa %s934, 1

</llo_original>
